<compile_context>
chip_gen: v5e
topology: v5e:2x2
jax: 0.10.0
libtpu: 0.0.40
codegen_flags: <defaults>
</compile_context>

<pallas_src>
import jax
import jax.numpy as jnp
from jax.experimental import pallas as pl
from jax.experimental.pallas import tpu as pltpu


def _round_up(x, m):
    return ((x + m - 1) // m) * m


def _vmem_capacity_bytes():
    """Physical VMEM per TensorCore. Narrow capability query only (never wraps
    kernel compilation); falls back to the smallest generation (v7x, 64 MiB)."""
    try:
        info = pltpu.get_tpu_info()
        cap = int(getattr(info, "vmem_capacity_bytes", 0) or 0)
        if cap > 0:
            return cap
    except Exception:
        pass
    return 64 << 20


def _vmem_limit(bytes_needed):
    cap = _vmem_capacity_bytes()
    ceiling = cap - (16 << 20)            # leave compiler/internal-scratch headroom
    want = int(bytes_needed * 1.3) + (4 << 20)
    return int(max(min(want, ceiling), min(32 << 20, ceiling)))


# ---------------------------------------------------------------------------
# Kernels
# ---------------------------------------------------------------------------

def _ffn_resident_kernel(x_ref, w1_ref, b1_ref, w2_ref, b2_ref, o_ref):
    # x:(TM,D) f32/bf16  w1:(D,Hp) bf16  b1:(1,Hp) f32  w2:(Hp,O) bf16  b2:(1,O) f32
    x = x_ref[...].astype(w1_ref.dtype)                       # in-kernel bf16 cast
    h = jnp.dot(x, w1_ref[...], preferred_element_type=jnp.float32)
    h = jnp.maximum(h + b1_ref[...], 0.0)                     # f32 bias + ReLU (VPU)
    y = jnp.dot(h.astype(w2_ref.dtype), w2_ref[...],
                preferred_element_type=jnp.float32)
    o_ref[...] = (y + b2_ref[...]).astype(o_ref.dtype)


def _ffn_streamed_kernel(x_ref, w1_ref, b1_ref, w2_ref, b2_ref, o_ref, acc_ref):
    # Hidden dim is tiled over the trailing ("arbitrary") grid axis; partial
    # contributions are accumulated in f32 scratch and finalized on the last step.
    h_idx = pl.program_id(1)

    @pl.when(h_idx == 0)
    def _init():
        acc_ref[...] = jnp.zeros_like(acc_ref)

    x = x_ref[...].astype(w1_ref.dtype)
    h = jnp.dot(x, w1_ref[...], preferred_element_type=jnp.float32)
    h = jnp.maximum(h + b1_ref[...], 0.0)
    acc_ref[...] += jnp.dot(h.astype(w2_ref.dtype), w2_ref[...],
                            preferred_element_type=jnp.float32)

    @pl.when(h_idx == pl.num_programs(1) - 1)
    def _finalize():
        o_ref[...] = (acc_ref[...] + b2_ref[...]).astype(o_ref.dtype)


# ---------------------------------------------------------------------------
# pallas_call builders
# ---------------------------------------------------------------------------

def _resident_call(M, D, Hp, O, tile_m, x_dtype, w_dtype, out_dtype):
    xb = jnp.dtype(x_dtype).itemsize
    wb = jnp.dtype(w_dtype).itemsize
    ob = jnp.dtype(out_dtype).itemsize
    need = (2 * tile_m * D * xb                 # double-buffered x tiles
            + 2 * tile_m * O * ob               # double-buffered out tiles
            + 2 * (D * Hp + Hp * O) * wb        # weights (default-buffered, resident)
            + 2 * (Hp + O) * 4                  # biases
            + tile_m * Hp * 4)                  # f32 hidden intermediate
    return pl.pallas_call(
        _ffn_resident_kernel,
        out_shape=jax.ShapeDtypeStruct((M, O), out_dtype),
        grid_spec=pltpu.PrefetchScalarGridSpec(
            num_scalar_prefetch=0,
            grid=(pl.cdiv(M, tile_m),),
            in_specs=[
                pl.BlockSpec((tile_m, D), lambda i: (i, 0)),   # X
                pl.BlockSpec((D, Hp), lambda i: (0, 0)),       # W1 (resident)
                pl.BlockSpec((1, Hp), lambda i: (0, 0)),       # b1
                pl.BlockSpec((Hp, O), lambda i: (0, 0)),       # W2 (resident)
                pl.BlockSpec((1, O), lambda i: (0, 0)),        # b2
            ],
            out_specs=pl.BlockSpec((tile_m, O), lambda i: (i, 0)),
        ),
        compiler_params=pltpu.CompilerParams(
            dimension_semantics=("parallel",),
            vmem_limit_bytes=_vmem_limit(need),
        ),
    )


def _streamed_call(M, D, Hp, O, tile_m, tile_h, x_dtype, w_dtype, out_dtype):
    xb = jnp.dtype(x_dtype).itemsize
    wb = jnp.dtype(w_dtype).itemsize
    ob = jnp.dtype(out_dtype).itemsize
    need = (2 * tile_m * D * xb
            + 2 * (D * tile_h + tile_h * O) * wb    # double-buffered weight tiles
            + 2 * (tile_h + O) * 4
            + 2 * tile_m * O * ob
            + tile_m * O * 4                        # f32 accumulator scratch
            + tile_m * tile_h * 4)                  # f32 hidden intermediate
    return pl.pallas_call(
        _ffn_streamed_kernel,
        out_shape=jax.ShapeDtypeStruct((M, O), out_dtype),
        grid_spec=pltpu.PrefetchScalarGridSpec(
            num_scalar_prefetch=0,
            grid=(pl.cdiv(M, tile_m), Hp // tile_h),
            in_specs=[
                pl.BlockSpec((tile_m, D), lambda i, h: (i, 0)),   # X
                pl.BlockSpec((D, tile_h), lambda i, h: (0, h)),   # W1 H-tile
                pl.BlockSpec((1, tile_h), lambda i, h: (0, h)),   # b1 H-tile
                pl.BlockSpec((tile_h, O), lambda i, h: (h, 0)),   # W2 H-tile
                pl.BlockSpec((1, O), lambda i, h: (0, 0)),        # b2
            ],
            out_specs=pl.BlockSpec((tile_m, O), lambda i, h: (i, 0)),
            scratch_shapes=[pltpu.VMEM((tile_m, O), jnp.float32)],
        ),
        compiler_params=pltpu.CompilerParams(
            dimension_semantics=("parallel", "arbitrary"),
            vmem_limit_bytes=_vmem_limit(need),
        ),
    )


# ---------------------------------------------------------------------------
# Dispatch + module
# ---------------------------------------------------------------------------

def feed_forward_pallas(x2d, w1, b1, w2, b2, *, out_dtype=jnp.bfloat16,
                        tile_m=None, tile_h=None, force_streamed=False):
    """x2d: (M, D).  w1: (D, Hp) bf16, b1: (1, Hp) f32, w2: (Hp, O) bf16,
    b2: (1, O) f32 (hidden dim zero-padded to a 128 multiple at init).
    Returns (M, O) in out_dtype."""
    M, D = x2d.shape
    Dw, Hp = w1.shape
    Hp2, O = w2.shape
    assert Dw == D and Hp2 == Hp, (w1.shape, w2.shape, x2d.shape)

    weight_bytes = (D * Hp + Hp * O) * jnp.dtype(w1.dtype).itemsize
    # Resident path needs the (default double-buffered) weights in VMEM plus
    # tile headroom; otherwise stream H-tiles (required for v7x / real FFNs).
    resident = (not force_streamed) and (
        2 * weight_bytes <= int(0.6 * _vmem_capacity_bytes()))

    if resident:
        tm = tile_m if tile_m is not None else min(256, _round_up(M, 8))
        call = _resident_call(M, D, Hp, O, tm, x2d.dtype, w1.dtype, out_dtype)
        return call(x2d, w1, b1, w2, b2)

    tm = tile_m if tile_m is not None else min(512, _round_up(M, 8))
    if tile_h is None:
        tile_h = 512 if Hp % 512 == 0 else (256 if Hp % 256 == 0 else 128)
    call = _streamed_call(M, D, Hp, O, tm, tile_h, x2d.dtype, w1.dtype, out_dtype)
    return call(x2d, w1, b1, w2, b2)


class FeedForward:
    """JAX/Pallas equivalent of the torch FeedForward module.

    dense1 = LazyLinear(ffn_input), dense2 = LazyLinear(ffn_output).
    torch's LazyLinear infers in-features on first call; here `in_features`
    is passed explicitly so weights can be materialized up front.
    Weights are stored [in, out] (transposed vs torch's [out, in]), the hidden
    dim zero-padded to a 128 multiple, cast to bf16 for the MXU; biases f32.
    """

    def __init__(self, ffn_input, ffn_output, in_features, key,
                 param_dtype=jnp.bfloat16, out_dtype=jnp.bfloat16):
        D, H, O = in_features, ffn_input, ffn_output
        k1, k2, k3, k4 = jax.random.split(key, 4)
        lim1 = float(D) ** -0.5
        lim2 = float(H) ** -0.5

        w1 = jax.random.uniform(k1, (D, H), jnp.float32, -lim1, lim1)
        b1 = jax.random.uniform(k2, (H,), jnp.float32, -lim1, lim1)
        w2 = jax.random.uniform(k3, (H, O), jnp.float32, -lim2, lim2)
        b2 = jax.random.uniform(k4, (O,), jnp.float32, -lim2, lim2)

        Hp = _round_up(H, 128)
        # Zero-padded hidden columns/rows contribute exactly 0 through
        # ReLU + matmul, so padding once at init is numerically exact.
        self.w1 = jnp.zeros((D, Hp), param_dtype).at[:, :H].set(w1.astype(param_dtype))
        self.b1 = jnp.zeros((1, Hp), jnp.float32).at[:, :H].set(b1[None, :])
        self.w2 = jnp.zeros((Hp, O), param_dtype).at[:H, :].set(w2.astype(param_dtype))
        self.b2 = b2[None, :].astype(jnp.float32)

        self.in_features = D
        self.ffn_input = H
        self.ffn_output = O
        self.out_dtype = out_dtype

    def __call__(self, X, *, force_streamed=False, tile_m=None, tile_h=None):
        lead = X.shape[:-1]
        x2d = X.reshape(-1, X.shape[-1])
        y2d = feed_forward_pallas(
            x2d, self.w1, self.b1, self.w2, self.b2,
            out_dtype=self.out_dtype, force_streamed=force_streamed,
            tile_m=tile_m, tile_h=tile_h)
        return y2d.reshape(*lead, self.ffn_output)


def _reference(x2d, ffn):
    w1 = ffn.w1.astype(jnp.float32)
    w2 = ffn.w2.astype(jnp.float32)
    h = jnp.maximum(x2d @ w1 + ffn.b1[0], 0.0)
    return h @ w2 + ffn.b2[0]


if __name__ == "__main__":
    key = jax.random.PRNGKey(0)
    k_x, k_p = jax.random.split(key)

    # Small, module-consistent shapes: (batch=2, seq=8, d_model=32),
    # hidden=256 so the streamed path accumulates over 2 H-tiles of 128.
    batch, seq, d_model = 2, 8, 32
    ffn_input, ffn_output = 256, 32

    X = jax.random.normal(k_x, (batch, seq, d_model), jnp.float32)
    ffn = FeedForward(ffn_input, ffn_output, in_features=d_model, key=k_p)
    ref = _reference(X.reshape(-1, d_model), ffn).reshape(batch, seq, ffn_output)

    # Path 1: resident-weights kernel (default dispatch at these sizes).
    out_res = jax.block_until_ready(ffn(X))
    assert out_res.shape == (batch, seq, ffn_output), out_res.shape
    assert out_res.dtype == jnp.bfloat16, out_res.dtype
    err_res = float(jnp.max(jnp.abs(out_res.astype(jnp.float32) - ref)))
    assert err_res < 5e-2, f"resident path mismatch: {err_res}"

    # Path 2: H-tiled streamed/accumulator kernel (used for large weights / v7x).
    out_str = jax.block_until_ready(ffn(X, force_streamed=True, tile_h=128))
    assert out_str.shape == (batch, seq, ffn_output), out_str.shape
    err_str = float(jnp.max(jnp.abs(out_str.astype(jnp.float32) - ref)))
    assert err_str < 5e-2, f"streamed path mismatch: {err_str}"

    print("KERNEL_OK")
</pallas_src>

<mosaic_0001>
module attributes {stable_mosaic.version = 11 : i64} {
  func.func @_ffn_resident_kernel(%arg0: i32, %arg1: memref<16x32xf32, #tpu.memory_space<vmem>>, %arg2: memref<32x256xbf16, #tpu.memory_space<vmem>>, %arg3: memref<1x256xf32, #tpu.memory_space<vmem>>, %arg4: memref<256x32xbf16, #tpu.memory_space<vmem>>, %arg5: memref<1x32xf32, #tpu.memory_space<vmem>>, %arg6: memref<16x32xbf16, #tpu.memory_space<vmem>>) attributes {dimension_semantics = [#tpu.dimension_semantics<parallel>], iteration_bounds = array<i64: 1>, scalar_prefetch = 0 : i64, scratch_operands = 0 : i64, tpu.core_type = #tpu.core_type<tc>, window_params = [{transform_indices = @transform_0, window_bounds = array<i64: 16, 32>}, {pipeline_mode = #tpu.pipeline_mode<synchronous>, transform_indices = @transform_1, window_bounds = array<i64: 32, 256>}, {pipeline_mode = #tpu.pipeline_mode<synchronous>, transform_indices = @transform_2, window_bounds = array<i64: 1, 256>}, {pipeline_mode = #tpu.pipeline_mode<synchronous>, transform_indices = @transform_3, window_bounds = array<i64: 256, 32>}, {pipeline_mode = #tpu.pipeline_mode<synchronous>, transform_indices = @transform_4, window_bounds = array<i64: 1, 32>}, {transform_indices = @transform_5, window_bounds = array<i64: 16, 32>}]} {
    %c0 = arith.constant 0 : index
    %c0_0 = arith.constant 0 : index
    %0 = vector.load %arg1[%c0, %c0_0] : memref<16x32xf32, #tpu.memory_space<vmem>>, vector<16x32xf32>
    %1 = arith.truncf %0 : vector<16x32xf32> to vector<16x32xbf16>
    %c0_1 = arith.constant 0 : index
    %c0_2 = arith.constant 0 : index
    %2 = vector.load %arg2[%c0_1, %c0_2] : memref<32x256xbf16, #tpu.memory_space<vmem>>, vector<32x256xbf16>
    %cst = arith.constant dense<0.000000e+00> : vector<16x256xf32>
    %3 = tpu.matmul %1, %2, %cst {dimension_numbers = #tpu.dot_dimension_numbers<[1], [0], [0], [1], [0, 0, 1, 1], [], []>} : vector<16x32xbf16>, vector<32x256xbf16>, vector<16x256xf32> -> vector<16x256xf32>
    %c0_3 = arith.constant 0 : index
    %c0_4 = arith.constant 0 : index
    %4 = vector.load %arg3[%c0_3, %c0_4] : memref<1x256xf32, #tpu.memory_space<vmem>>, vector<1x256xf32>
    %5 = vector.broadcast %4 : vector<1x256xf32> to vector<16x256xf32>
    %6 = arith.addf %3, %5 : vector<16x256xf32>
    %cst_5 = arith.constant 0.000000e+00 : f32
    %7 = vector.broadcast %cst_5 : f32 to vector<16x256xf32>
    %8 = arith.maximumf %6, %7 : vector<16x256xf32>
    %9 = arith.truncf %8 : vector<16x256xf32> to vector<16x256xbf16>
    %c0_6 = arith.constant 0 : index
    %c0_7 = arith.constant 0 : index
    %10 = vector.load %arg4[%c0_6, %c0_7] : memref<256x32xbf16, #tpu.memory_space<vmem>>, vector<256x32xbf16>
    %cst_8 = arith.constant dense<0.000000e+00> : vector<16x32xf32>
    %11 = tpu.matmul %9, %10, %cst_8 {dimension_numbers = #tpu.dot_dimension_numbers<[1], [0], [0], [1], [0, 0, 1, 1], [], []>} : vector<16x256xbf16>, vector<256x32xbf16>, vector<16x32xf32> -> vector<16x32xf32>
    %c0_9 = arith.constant 0 : index
    %c0_10 = arith.constant 0 : index
    %12 = vector.load %arg5[%c0_9, %c0_10] : memref<1x32xf32, #tpu.memory_space<vmem>>, vector<1x32xf32>
    %13 = vector.broadcast %12 : vector<1x32xf32> to vector<16x32xf32>
    %14 = arith.addf %11, %13 : vector<16x32xf32>
    %15 = arith.truncf %14 : vector<16x32xf32> to vector<16x32xbf16>
    %c0_11 = arith.constant 0 : index
    %c0_12 = arith.constant 0 : index
    %16 = vector.load %arg6[%c0_11, %c0_12] : memref<16x32xbf16, #tpu.memory_space<vmem>>, vector<16x32xbf16>
    tpu.vector_store %arg6[%c0_11, %c0_12], %15 {strides = array<i32>} : memref<16x32xbf16, #tpu.memory_space<vmem>>, vector<16x32xbf16>,
    return
  }
  func.func @transform_0(%arg0: i32) -> (i32, i32) {
    %c0_i32 = arith.constant 0 : i32
    %c0_i32_0 = arith.constant 0 : i32
    return %arg0, %c0_i32 : i32, i32
  }
  func.func @transform_1(%arg0: i32) -> (i32, i32) {
    %c0_i32 = arith.constant 0 : i32
    %c0_i32_0 = arith.constant 0 : i32
    %c0_i32_1 = arith.constant 0 : i32
    return %c0_i32, %c0_i32_0 : i32, i32
  }
  func.func @transform_2(%arg0: i32) -> (i32, i32) {
    %c0_i32 = arith.constant 0 : i32
    %c0_i32_0 = arith.constant 0 : i32
    %c0_i32_1 = arith.constant 0 : i32
    return %c0_i32, %c0_i32_0 : i32, i32
  }
  func.func @transform_3(%arg0: i32) -> (i32, i32) {
    %c0_i32 = arith.constant 0 : i32
    %c0_i32_0 = arith.constant 0 : i32
    %c0_i32_1 = arith.constant 0 : i32
    return %c0_i32, %c0_i32_0 : i32, i32
  }
  func.func @transform_4(%arg0: i32) -> (i32, i32) {
    %c0_i32 = arith.constant 0 : i32
    %c0_i32_0 = arith.constant 0 : i32
    %c0_i32_1 = arith.constant 0 : i32
    return %c0_i32, %c0_i32_0 : i32, i32
  }
  func.func @transform_5(%arg0: i32) -> (i32, i32) {
    %c0_i32 = arith.constant 0 : i32
    %c0_i32_0 = arith.constant 0 : i32
    return %arg0, %c0_i32 : i32, i32
  }
}

</mosaic_0001>

<llo_original>
// kernel: tpu_custom_call.1
$region0: #{tpu_custom_call.1}
  #allocation0 [shape = 'u32[]', space=smem, size = 0x4, offset = 0x4, fixed_abs, tag = 'smem constant byte address 0x4 - core index']
  #allocation1 [shape = 'u32[72,128]{1,0:T(1,128)}', space=vmem, size = 0x9000, scoped, tag = 'internal scratch']
  %s0 = inlined_call_operand.vmem [shape: f32[16,32], index: 0, kind: input, shape index: {}]
  %s1 = inlined_call_operand.vmem [shape: bf16[32,256], index: 1, kind: input, shape index: {}]
  %s2 = inlined_call_operand.vmem [shape: f32[1,256], index: 2, kind: input, shape index: {}]
  %s3 = inlined_call_operand.vmem [shape: bf16[256,32], index: 3, kind: input, shape index: {}]
  %s4 = inlined_call_operand.vmem [shape: f32[1,32], index: 4, kind: input, shape index: {}]
  %s5 = inlined_call_operand.hbm [shape: bf16[16,32], index: 5, kind: output, shape index: {}]
  %s6 = sld [smem:[#allocation0]]
  $region30: #{tpu_custom_call.1} parent=0
    _
  %s8 = ssub.s32 1, %s6
  %s9 = scalar_select 0, %s8, %s6
  $region1: #{tpu_custom_call.1} parent=0
    #allocation2 [shape = 'u8[4096]{0}', space=vmem, size = 0x1000, scoped, tag = 'output window, operand 0, single buffered']
    #allocation3 [shape = 's32[1]{0}', space=sflag, size = 0x4, scoped, tag = 'scoped memory for tpu_custom_call.1']
    %10 = vsyncpa [#allocation3], 0
    // Predicated region
    $region2: #{tpu_custom_call.1} parent=1 // pred_check
      _
    $region3: #{tpu_custom_call.1} parent=1 // pred_check_branch
      %12 = sbr.rel (0) target = $region5
    $region4: #{tpu_custom_call.1} parent=1 // pred_region
      _
    $region5: #{tpu_custom_call.1} parent=1 // pred_fallthru
      _
    // Predicated region
    $region6: #{tpu_custom_call.1} parent=1 // pred_check
      _
    $region7: #{tpu_custom_call.1} parent=1 // pred_check_branch
      %14 = sbr.rel (0) target = $region9
    $region8: #{tpu_custom_call.1} parent=1 // pred_region
      _
    $region9: #{tpu_custom_call.1} parent=1 // pred_fallthru
      _
    // Predicated region
    $region10: #{tpu_custom_call.1} parent=1 // pred_check
      _
    $region11: #{tpu_custom_call.1} parent=1 // pred_check_branch
      %16 = sbr.rel (0) target = $region13
    $region12: #{tpu_custom_call.1} parent=1 // pred_region
      _
    $region13: #{tpu_custom_call.1} parent=1 // pred_fallthru
      _
    // Predicated region
    $region14: #{tpu_custom_call.1} parent=1 // pred_check
      _
    $region15: #{tpu_custom_call.1} parent=1 // pred_check_branch
      %18 = sbr.rel (0) target = $region17
    $region16: #{tpu_custom_call.1} parent=1 // pred_region
      _
    $region17: #{tpu_custom_call.1} parent=1 // pred_fallthru
      _
    // Predicated region
    $region18: #{tpu_custom_call.1} parent=1 // pred_check
      _
    $region19: #{tpu_custom_call.1} parent=1 // pred_check_branch
      %20 = sbr.rel (0) target = $region21
    $region20: #{tpu_custom_call.1} parent=1 // pred_region
      _
    $region21: #{tpu_custom_call.1} parent=1 // pred_fallthru
      _
    %v22 = vld [vmem:[%s0] sm:$0xff]
    %v23 = vld [vmem:[%s0 + $0x8] sm:$0xff]
    %v24 = vpack.c.bf16 %v23, %v22
    %v25 = vld [vmem:[%s1] sm:$0xff]
    %v26 = vld [vmem:[%s1 + $0x8] sm:$0xff]
    %v27 = vld [vmem:[%s1 + $0x10] sm:$0xff]
    %v28 = vld [vmem:[%s1 + $0x18] sm:$0xff]
    %v29 = vld [vmem:[%s2] sm:$0x3]
    %v31 = vperm.slane %v29, 0
    %v32 = vperm.slane %v29, 1
    %v39 = vunpack.c.l.b16 %v25
    %v40 = vunpack.c.h.b16 %v25
    %v41 = vunpack.c.l.b16 %v26
    %v42 = vunpack.c.h.b16 %v26
    %v43 = vunpack.c.l.b16 %v27
    %v44 = vunpack.c.h.b16 %v27
    %v45 = vunpack.c.l.b16 %v28
    %v46 = vunpack.c.h.b16 %v28
    %v47 = vpack.c.b16 %v41, %v39
    %v48 = vpack.c.b16 %v42, %v40
    %v49 = vpack.c.b16 %v45, %v43
    %v50 = vpack.c.b16 %v46, %v44
    %vm55 = vcmask 261120
    %v57 = vsel %vm55, %v24, 0
    %59 = vmatpush.bf16.msra.mxu0 0
    %60 = vmatpush.bf16.msra.mxu0 0
    %61 = vmatpush.bf16.msra.mxu0 0
    %62 = vmatpush.bf16.msra.mxu0 0
    %63 = vmatpush.bf16.msra.mxu0 0
    %64 = vmatpush.bf16.msra.mxu0 0
    %65 = vmatpush.bf16.msra.mxu0 %v49
    %66 = vmatpush.bf16.msra.mxu0 %v47
    %67 = vmatmul.bf16.gmra.mxu0 %v57
    %v68 = vpop.f32.mrf.mxu0
    %v69 = vadd.f32 %v31, %v68
    %v70 = vpop.f32.mrf.mxu0
    %v71 = vadd.f32 %v31, %v70
    %72 = vdwg.mxu0
    %73 = vmatpush.bf16.msra.mxu0 0
    %74 = vmatpush.bf16.msra.mxu0 0
    %75 = vmatpush.bf16.msra.mxu0 0
    %76 = vmatpush.bf16.msra.mxu0 0
    %77 = vmatpush.bf16.msra.mxu0 0
    %78 = vmatpush.bf16.msra.mxu0 0
    %79 = vmatpush.bf16.msra.mxu0 %v50
    %80 = vmatpush.bf16.msra.mxu0 %v48
    %81 = vmatmul.bf16.gmra.mxu0 %v57
    %v82 = vpop.f32.mrf.mxu0
    %v83 = vadd.f32 %v32, %v82
    %v84 = vpop.f32.mrf.mxu0
    %v85 = vadd.f32 %v32, %v84
    %86 = vdwg.mxu0
    %v87 = vmax.f32 %v69, 0.0
    %v88 = vmax.f32 %v83, 0.0
    %v89 = vmax.f32 %v71, 0.0
    %v90 = vmax.f32 %v85, 0.0
    %v91 = vpack.c.bf16 %v89, %v87
    %v92 = vpack.c.bf16 %v90, %v88
    %v93 = vld [vmem:[%s3] sm:$0xf]
    %v94 = vld [vmem:[%s3 + $0x4] sm:$0xf]
    %v95 = vld [vmem:[%s3 + $0x8] sm:$0xf]
    %v96 = vld [vmem:[%s3 + $0xc] sm:$0xf]
    %v97 = vld [vmem:[%s3 + $0x10] sm:$0xf]
    %v98 = vld [vmem:[%s3 + $0x14] sm:$0xf]
    %v99 = vld [vmem:[%s3 + $0x18] sm:$0xf]
    %v100 = vld [vmem:[%s3 + $0x1c] sm:$0xf]
    %v101 = vld [vmem:[%s3 + $0x20] sm:$0xf]
    %v102 = vld [vmem:[%s3 + $0x24] sm:$0xf]
    %v103 = vld [vmem:[%s3 + $0x28] sm:$0xf]
    %v104 = vld [vmem:[%s3 + $0x2c] sm:$0xf]
    %v105 = vld [vmem:[%s3 + $0x30] sm:$0xf]
    %v106 = vld [vmem:[%s3 + $0x34] sm:$0xf]
    %v107 = vld [vmem:[%s3 + $0x38] sm:$0xf]
    %v108 = vld [vmem:[%s3 + $0x3c] sm:$0xf]
    %v109 = vld [vmem:[%s3 + $0x40] sm:$0xf]
    %v110 = vld [vmem:[%s3 + $0x44] sm:$0xf]
    %v111 = vld [vmem:[%s3 + $0x48] sm:$0xf]
    %v112 = vld [vmem:[%s3 + $0x4c] sm:$0xf]
    %v113 = vld [vmem:[%s3 + $0x50] sm:$0xf]
    %v114 = vld [vmem:[%s3 + $0x54] sm:$0xf]
    %v115 = vld [vmem:[%s3 + $0x58] sm:$0xf]
    %v116 = vld [vmem:[%s3 + $0x5c] sm:$0xf]
    %v117 = vld [vmem:[%s3 + $0x60] sm:$0xf]
    %v118 = vld [vmem:[%s3 + $0x64] sm:$0xf]
    %v119 = vld [vmem:[%s3 + $0x68] sm:$0xf]
    %v120 = vld [vmem:[%s3 + $0x6c] sm:$0xf]
    %v121 = vld [vmem:[%s3 + $0x70] sm:$0xf]
    %v122 = vld [vmem:[%s3 + $0x74] sm:$0xf]
    %v123 = vld [vmem:[%s3 + $0x78] sm:$0xf]
    %v124 = vld [vmem:[%s3 + $0x7c] sm:$0xf]
    %v125 = vld [vmem:[%s4] sm:$0x1]
    %v127 = vperm.slane %v125, 0
    %v161 = vunpack.c.l.b16 %v93
    %v162 = vunpack.c.l.b16 %v94
    %v163 = vunpack.c.l.b16 %v95
    %v164 = vunpack.c.l.b16 %v96
    %v165 = vunpack.c.l.b16 %v97
    %v166 = vunpack.c.l.b16 %v98
    %v167 = vunpack.c.l.b16 %v99
    %v168 = vunpack.c.l.b16 %v100
    %v169 = vunpack.c.l.b16 %v101
    %v170 = vunpack.c.l.b16 %v102
    %v171 = vunpack.c.l.b16 %v103
    %v172 = vunpack.c.l.b16 %v104
    %v173 = vunpack.c.l.b16 %v105
    %v174 = vunpack.c.l.b16 %v106
    %v175 = vunpack.c.l.b16 %v107
    %v176 = vunpack.c.l.b16 %v108
    %v177 = vunpack.c.l.b16 %v109
    %v178 = vunpack.c.l.b16 %v110
    %v179 = vunpack.c.l.b16 %v111
    %v180 = vunpack.c.l.b16 %v112
    %v181 = vunpack.c.l.b16 %v113
    %v182 = vunpack.c.l.b16 %v114
    %v183 = vunpack.c.l.b16 %v115
    %v184 = vunpack.c.l.b16 %v116
    %v185 = vunpack.c.l.b16 %v117
    %v186 = vunpack.c.l.b16 %v118
    %v187 = vunpack.c.l.b16 %v119
    %v188 = vunpack.c.l.b16 %v120
    %v189 = vunpack.c.l.b16 %v121
    %v190 = vunpack.c.l.b16 %v122
    %v191 = vunpack.c.l.b16 %v123
    %v192 = vunpack.c.l.b16 %v124
    %v193 = vpack.c.b16 %v162, %v161
    %v194 = vpack.c.b16 %v164, %v163
    %v195 = vpack.c.b16 %v166, %v165
    %v196 = vpack.c.b16 %v168, %v167
    %v197 = vpack.c.b16 %v170, %v169
    %v198 = vpack.c.b16 %v172, %v171
    %v199 = vpack.c.b16 %v174, %v173
    %v200 = vpack.c.b16 %v176, %v175
    %v201 = vpack.c.b16 %v178, %v177
    %v202 = vpack.c.b16 %v180, %v179
    %v203 = vpack.c.b16 %v182, %v181
    %v204 = vpack.c.b16 %v184, %v183
    %v205 = vpack.c.b16 %v186, %v185
    %v206 = vpack.c.b16 %v188, %v187
    %v207 = vpack.c.b16 %v190, %v189
    %v208 = vpack.c.b16 %v192, %v191
    %225 = vmatpush.bf16.msra.mxu0 %v200
    %226 = vmatpush.bf16.msra.mxu0 %v199
    %227 = vmatpush.bf16.msra.mxu0 %v198
    %228 = vmatpush.bf16.msra.mxu0 %v197
    %229 = vmatpush.bf16.msra.mxu0 %v196
    %230 = vmatpush.bf16.msra.mxu0 %v195
    %231 = vmatpush.bf16.msra.mxu0 %v194
    %232 = vmatpush.bf16.msra.mxu0 %v193
    %233 = vmatmul.bf16.gmra.mxu0 %v91
    %v234 = vpop.f32.mrf.mxu0
    %v235 = vadd.f32 %v127, %v234
    %v236 = vpop.f32.mrf.mxu0
    %v237 = vadd.f32 %v127, %v236
    %238 = vdwg.mxu0
    %239 = vmatpush.bf16.msra.mxu0 %v208
    %240 = vmatpush.bf16.msra.mxu0 %v207
    %241 = vmatpush.bf16.msra.mxu0 %v206
    %242 = vmatpush.bf16.msra.mxu0 %v205
    %243 = vmatpush.bf16.msra.mxu0 %v204
    %244 = vmatpush.bf16.msra.mxu0 %v203
    %245 = vmatpush.bf16.msra.mxu0 %v202
    %246 = vmatpush.bf16.msra.mxu0 %v201
    %247 = vmatmul.bf16.gmra.mxu0 %v92
    %v248 = vpop.f32.mrf.mxu0
    %v249 = vadd.f32 %v235, %v248
    %v250 = vpop.f32.mrf.mxu0
    %v251 = vadd.f32 %v237, %v250
    %252 = vdwg.mxu0
    %v253 = vpack.c.bf16 %v249, %v249
    %v254 = vpack.c.bf16 %v251, %v251
    %vm255 = vcmask 257024
    %256 = vst.msk [vmem:[#allocation2] sm:$0xf] %vm255, %v253
    %257 = vst.msk [vmem:[#allocation2 + $0x4] sm:$0xf] %vm255, %v254
    // Predicated region
    $region22: #{tpu_custom_call.1} parent=1 // pred_check
      _
    $region23: #{tpu_custom_call.1} parent=1 // pred_check_branch
      %259 = sbr.rel (0) target = $region25
    $region24: #{tpu_custom_call.1} parent=1 // pred_region
      %261 = vsyncadd [#allocation3], 0
      %s262 = sshll.u32 [#allocation2], 4
      %s263 = int_to_ptr.vmem [resolvable:$true] %s262
      %s264 = sshll.u32 %s5, 4
      %s265 = int_to_ptr.hbm [resolvable:$true] %s264
      %270 = dma.vmem_to_hbm [thread:$0]  %s263, 128, %s265, [#allocation3], 64, 64, 4
    $region25: #{tpu_custom_call.1} parent=1 // pred_fallthru
      _
    // Predicated region
    $region26: #{tpu_custom_call.1} parent=1 // pred_check
      _
    $region27: #{tpu_custom_call.1} parent=1 // pred_check_branch
      %272 = sbr.rel (0) target = $region29
    $region28: #{tpu_custom_call.1} parent=1 // pred_region
      %274 = dma.done [#allocation3], 128
    $region29: #{tpu_custom_call.1} parent=1 // pred_fallthru
      _
    %275 = vsyncpa [#allocation3], 1

</llo_original>
